<compile_context>
chip_gen: v7x
topology: tpu7x:2x2x1
jax: 0.10.0
libtpu: 0.0.40
codegen_flags: <defaults>
</compile_context>

<pallas_src>
import jax
import jax.numpy as jnp
from jax import lax
from jax.experimental import pallas as pl
from jax.experimental.pallas import tpu as pltpu

GAMMA = 2          # statically 2 -> exp(2*log_*) instead of float pow
ALPHA = 0.25

_LANES = 128                       # vreg lane width
_COLS = 512                        # lane-dense column width of flattened logits
_NEG_PAD = -1e4                    # pad logit: p^2*log(1-p) is exactly 0
_BLOCK_BYTES = 8 * 1024 * 1024     # per-block budget (v7x-safe; v5e/v6e may raise)


def _round_up(x, m):
    return ((x + m - 1) // m) * m


def focal_loss_with_sigmoid(inputs, target, *, alpha=ALPHA, block_rows=None,
                            num_partials=1, block_bytes=_BLOCK_BYTES,
                            core_parallel=False):
    """inputs: (N, C) float logits, target: (N,) integer class ids -> scalar f32."""
    n, c = inputs.shape
    if inputs.dtype != jnp.float32 and inputs.dtype != jnp.bfloat16:
        inputs = inputs.astype(jnp.float32)      # keep f32/bf16 as-is (no HBM copy)
    tgt = target.astype(jnp.int32).reshape(n, 1)

    itemsize = inputs.dtype.itemsize
    sub_pack = 8 * (4 // itemsize)               # packed sublane multiple: f32 8, bf16 16

    # ---- lane-dense flattened view of the (N, C) logits ----------------------
    total = n * c
    rows_needed = pl.cdiv(total, _COLS)
    if block_rows is None:
        tile_rows = (block_bytes // (_COLS * itemsize)) // sub_pack * sub_pack
    else:
        tile_rows = _round_up(block_rows, sub_pack)
    tile_rows = max(sub_pack, min(tile_rows, _round_up(rows_needed, sub_pack)))

    num_tiles = pl.cdiv(rows_needed, tile_rows)
    num_partials = max(1, min(num_partials, num_tiles))
    tiles_per_partial = pl.cdiv(num_tiles, num_partials)
    rows_pad = num_partials * tiles_per_partial * tile_rows

    flat = inputs.reshape(-1)
    pad = rows_pad * _COLS - total
    if pad:
        flat = jnp.pad(flat, (0, pad), constant_values=_NEG_PAD)
    x2d = flat.reshape(rows_pad, _COLS)

    # ---- tiny positive-class gather: x[i, target[i]] (N elements, f32) -------
    pos = jnp.take_along_axis(inputs, tgt, axis=1).reshape(-1).astype(jnp.float32)
    pos_rows = _round_up(pl.cdiv(n, _LANES), 8)
    ppad = pos_rows * _LANES - n
    if ppad:
        pos = jnp.pad(pos, (0, ppad))
    pos2d = pos.reshape(pos_rows, _LANES)

    one_m_alpha = 1.0 - alpha

    def kernel(x_ref, pos_ref, o_ref, acc_ref):
        g = pl.program_id(0)
        i = pl.program_id(1)

        @pl.when(i == 0)
        def _init():
            acc_ref[...] = jnp.zeros_like(acc_ref)

        # ---- hot loop: every flattened element pays only the negative branch.
        x = x_ref[...].astype(jnp.float32)            # (tile_rows, _COLS)
        z = jnp.exp(-jnp.abs(x))                      # exp(-|x|)
        l1 = jnp.log1p(z)
        log_p = jnp.minimum(x, 0.0) - l1              # log(sigmoid(x))
        log_q = jnp.minimum(-x, 0.0) - l1             # log(1 - sigmoid(x))
        neg = jnp.exp(2.0 * log_p) * log_q            # p^2 * log(1-p); 0 for pad rows

        # vreg-shaped accumulation: pure vector adds (no per-step cross-lane reduce)
        if tile_rows == 8:
            acc_ref[...] += neg
        else:
            acc_ref[...] += jnp.sum(neg.reshape(tile_rows // 8, 8, _COLS), axis=0)

        @pl.when(i == tiles_per_partial - 1)
        def _final():
            partial = -one_m_alpha * jnp.sum(acc_ref[...])

            # Positive-class correction (tiny array), folded into partial 0 only.
            xp = pos_ref[...]
            zp = jnp.exp(-jnp.abs(xp))
            lp1 = jnp.log1p(zp)
            lp = jnp.minimum(xp, 0.0) - lp1           # log(p)
            lq = jnp.minimum(-xp, 0.0) - lp1          # log(1-p)
            corr = (alpha * jnp.exp(2.0 * lq) * lp
                    - one_m_alpha * jnp.exp(2.0 * lp) * lq)
            r = lax.broadcasted_iota(jnp.int32, corr.shape, 0)
            l = lax.broadcasted_iota(jnp.int32, corr.shape, 1)
            corr = jnp.where(r * _LANES + l < n, corr, 0.0)
            partial = partial - jnp.where(g == 0, jnp.sum(corr), 0.0)

            o_ref[...] = jnp.broadcast_to(partial, (1, _LANES))

    sem0 = pltpu.CORE_PARALLEL if core_parallel else pltpu.PARALLEL
    out = pl.pallas_call(
        kernel,
        out_shape=jax.ShapeDtypeStruct((1, num_partials * _LANES), jnp.float32),
        grid_spec=pltpu.PrefetchScalarGridSpec(
            num_scalar_prefetch=0,
            grid=(num_partials, tiles_per_partial),
            in_specs=[
                pl.BlockSpec((tile_rows, _COLS),
                             lambda g, i: (g * tiles_per_partial + i, 0)),
                pl.BlockSpec((pos_rows, _LANES), lambda g, i: (0, 0)),
            ],
            out_specs=pl.BlockSpec((1, _LANES), lambda g, i: (0, g)),
            scratch_shapes=[pltpu.VMEM((8, _COLS), jnp.float32)],
        ),
        compiler_params=pltpu.CompilerParams(
            dimension_semantics=(sem0, pltpu.ARBITRARY),
            vmem_limit_bytes=48 * 1024 * 1024,
        ),
    )(x2d, pos2d)

    # one partial per slice of the leading axis (all 128 lanes hold the same value)
    return jnp.sum(out[0, ::_LANES])


def _reference(inputs, target, alpha=ALPHA, gamma=GAMMA):
    """Plain-JAX translation of the PyTorch module's forward."""
    _, c = inputs.shape
    x = inputs.astype(jnp.float32)
    pos_mask = target[:, None] == jnp.arange(c)[None, :]
    p = jax.nn.sigmoid(x)
    pos_sum = jnp.sum(jnp.where(pos_mask, (1 - p) ** gamma * jnp.log(p), 0.0))
    neg_sum = jnp.sum(jnp.where(pos_mask, 0.0, p ** gamma * jnp.log(1 - p)))
    return -pos_sum * alpha - neg_sum * (1 - alpha)


if __name__ == "__main__":
    key = jax.random.PRNGKey(0)

    # Primary small case matching the module: (N, C) logits + (N,) integer labels.
    k1, k2 = jax.random.split(key)
    N, C = 8, 32
    inputs = jax.random.normal(k1, (N, C), dtype=jnp.float32)
    target = jax.random.randint(k2, (N,), 0, C, dtype=jnp.int32)
    loss = focal_loss_with_sigmoid(inputs, target)
    jax.block_until_ready(loss)
    ref = _reference(inputs, target)
    assert jnp.allclose(loss, ref, rtol=1e-4, atol=1e-4), (loss, ref)

    # Multi-tile, multi-partial grid path with flattened-padding + correction select.
    k3, k4 = jax.random.split(k2)
    N2, C2 = 37, 300
    inputs2 = jax.random.normal(k3, (N2, C2), dtype=jnp.float32) * 3.0
    target2 = jax.random.randint(k4, (N2,), 0, C2, dtype=jnp.int32)
    loss2 = focal_loss_with_sigmoid(inputs2, target2, block_rows=8, num_partials=2)
    jax.block_until_ready(loss2)
    ref2 = _reference(inputs2, target2)
    assert jnp.allclose(loss2, ref2, rtol=1e-4, atol=1e-4), (loss2, ref2)

    # bf16 logits: exercises the packed (16, 128) sublane tiling + in-kernel cast.
    k5, k6 = jax.random.split(k4)
    N3, C3 = 19, 45
    inputs3 = (jax.random.normal(k5, (N3, C3), dtype=jnp.float32) * 2.0).astype(jnp.bfloat16)
    target3 = jax.random.randint(k6, (N3,), 0, C3, dtype=jnp.int32)
    loss3 = focal_loss_with_sigmoid(inputs3, target3)
    jax.block_until_ready(loss3)
    ref3 = _reference(inputs3, target3)
    assert jnp.allclose(loss3, ref3, rtol=1e-3, atol=1e-3), (loss3, ref3)

    print("KERNEL_OK")
</pallas_src>

<mosaic_0001>
module attributes {stable_mosaic.version = 11 : i64} {
  func.func @kernel(%arg0: i32, %arg1: i32, %arg2: memref<8x512xf32, #tpu.memory_space<vmem>>, %arg3: memref<8x128xf32, #tpu.memory_space<vmem>>, %arg4: memref<1x128xf32, #tpu.memory_space<vmem>>, %arg5: memref<8x512xf32, #tpu.memory_space<vmem>>) attributes {dimension_semantics = [#tpu.dimension_semantics<parallel>, #tpu.dimension_semantics<arbitrary>], iteration_bounds = array<i64: 1, 1>, scalar_prefetch = 0 : i64, scratch_operands = 1 : i64, tpu.core_type = #tpu.core_type<tc>, window_params = [{transform_indices = @transform_0, window_bounds = array<i64: 8, 512>}, {pipeline_mode = #tpu.pipeline_mode<synchronous>, transform_indices = @transform_1, window_bounds = array<i64: 8, 128>}, {transform_indices = @transform_2, window_bounds = array<i64: 1, 128>}]} {
    %c0_i32 = arith.constant 0 : i32
    %0 = arith.cmpi eq, %arg1, %c0_i32 : i32
    %1 = arith.extui %0 : i1 to i32
    %c0_i32_0 = arith.constant 0 : i32
    %2 = arith.cmpi ne, %1, %c0_i32_0 : i32
    scf.if %2 {
      %cst_12 = arith.constant 0.000000e+00 : f32
      %27 = vector.broadcast %cst_12 : f32 to vector<8x512xf32>
      %c0_13 = arith.constant 0 : index
      %c0_14 = arith.constant 0 : index
      %28 = vector.load %arg5[%c0_13, %c0_14] : memref<8x512xf32, #tpu.memory_space<vmem>>, vector<8x512xf32>
      tpu.vector_store %arg5[%c0_13, %c0_14], %27 {strides = array<i32>} : memref<8x512xf32, #tpu.memory_space<vmem>>, vector<8x512xf32>,
    } else {
    }
    %c0 = arith.constant 0 : index
    %c0_1 = arith.constant 0 : index
    %3 = vector.load %arg2[%c0, %c0_1] : memref<8x512xf32, #tpu.memory_space<vmem>>, vector<8x512xf32>
    %4 = math.absf %3 : vector<8x512xf32>
    %cst = arith.constant 0.000000e+00 : f32
    %5 = vector.broadcast %cst : f32 to vector<8x512xf32>
    %6 = arith.subf %5, %4 : vector<8x512xf32>
    %7 = math.exp %6 : vector<8x512xf32>
    %8 = math.log1p %7 : vector<8x512xf32>
    %cst_2 = arith.constant 0.000000e+00 : f32
    %9 = vector.broadcast %cst_2 : f32 to vector<8x512xf32>
    %10 = arith.minimumf %3, %9 : vector<8x512xf32>
    %11 = arith.subf %10, %8 : vector<8x512xf32>
    %cst_3 = arith.constant 0.000000e+00 : f32
    %12 = vector.broadcast %cst_3 : f32 to vector<8x512xf32>
    %13 = arith.subf %12, %3 : vector<8x512xf32>
    %cst_4 = arith.constant 0.000000e+00 : f32
    %14 = vector.broadcast %cst_4 : f32 to vector<8x512xf32>
    %15 = arith.minimumf %13, %14 : vector<8x512xf32>
    %16 = arith.subf %15, %8 : vector<8x512xf32>
    %cst_5 = arith.constant 2.000000e+00 : f32
    %17 = vector.broadcast %cst_5 : f32 to vector<8x512xf32>
    %18 = arith.mulf %17, %11 : vector<8x512xf32>
    %19 = math.exp %18 : vector<8x512xf32>
    %20 = arith.mulf %19, %16 : vector<8x512xf32>
    %c0_6 = arith.constant 0 : index
    %c0_7 = arith.constant 0 : index
    %21 = vector.load %arg5[%c0_6, %c0_7] : memref<8x512xf32, #tpu.memory_space<vmem>>, vector<8x512xf32>
    %22 = arith.addf %21, %20 : vector<8x512xf32>
    %c0_8 = arith.constant 0 : index
    %c0_9 = arith.constant 0 : index
    %23 = vector.load %arg5[%c0_8, %c0_9] : memref<8x512xf32, #tpu.memory_space<vmem>>, vector<8x512xf32>
    tpu.vector_store %arg5[%c0_8, %c0_9], %22 {strides = array<i32>} : memref<8x512xf32, #tpu.memory_space<vmem>>, vector<8x512xf32>,
    %c0_i32_10 = arith.constant 0 : i32
    %24 = arith.cmpi eq, %arg1, %c0_i32_10 : i32
    %25 = arith.extui %24 : i1 to i32
    %c0_i32_11 = arith.constant 0 : i32
    %26 = arith.cmpi ne, %25, %c0_i32_11 : i32
    scf.if %26 {
      %c0_12 = arith.constant 0 : index
      %c0_13 = arith.constant 0 : index
      %27 = vector.load %arg5[%c0_12, %c0_13] : memref<8x512xf32, #tpu.memory_space<vmem>>, vector<8x512xf32>
      %28 = vector.shape_cast %27 : vector<8x512xf32> to vector<1x8x512xf32>
      %cst_14 = arith.constant dense<0.000000e+00> : vector<1xf32>
      %29 = vector.multi_reduction <add>, %28, %cst_14 [1, 2] : vector<1x8x512xf32> to vector<1xf32>
      %30 = vector.shape_cast %29 : vector<1xf32> to vector<1x1x1xf32>
      %31 = vector.extract %30[0, 0, 0] : f32 from vector<1x1x1xf32>
      %cst_15 = arith.constant -7.500000e-01 : f32
      %32 = arith.mulf %cst_15, %31 : f32
      %c0_16 = arith.constant 0 : index
      %c0_17 = arith.constant 0 : index
      %33 = vector.load %arg3[%c0_16, %c0_17] : memref<8x128xf32, #tpu.memory_space<vmem>>, vector<8x128xf32>
      %34 = math.absf %33 : vector<8x128xf32>
      %cst_18 = arith.constant 0.000000e+00 : f32
      %35 = vector.broadcast %cst_18 : f32 to vector<8x128xf32>
      %36 = arith.subf %35, %34 : vector<8x128xf32>
      %37 = math.exp %36 : vector<8x128xf32>
      %38 = math.log1p %37 : vector<8x128xf32>
      %cst_19 = arith.constant 0.000000e+00 : f32
      %39 = vector.broadcast %cst_19 : f32 to vector<8x128xf32>
      %40 = arith.minimumf %33, %39 : vector<8x128xf32>
      %41 = arith.subf %40, %38 : vector<8x128xf32>
      %cst_20 = arith.constant 0.000000e+00 : f32
      %42 = vector.broadcast %cst_20 : f32 to vector<8x128xf32>
      %43 = arith.subf %42, %33 : vector<8x128xf32>
      %cst_21 = arith.constant 0.000000e+00 : f32
      %44 = vector.broadcast %cst_21 : f32 to vector<8x128xf32>
      %45 = arith.minimumf %43, %44 : vector<8x128xf32>
      %46 = arith.subf %45, %38 : vector<8x128xf32>
      %cst_22 = arith.constant 2.000000e+00 : f32
      %47 = vector.broadcast %cst_22 : f32 to vector<8x128xf32>
      %48 = arith.mulf %47, %46 : vector<8x128xf32>
      %49 = math.exp %48 : vector<8x128xf32>
      %cst_23 = arith.constant 2.500000e-01 : f32
      %50 = vector.broadcast %cst_23 : f32 to vector<8x128xf32>
      %51 = arith.mulf %50, %49 : vector<8x128xf32>
      %52 = arith.mulf %51, %41 : vector<8x128xf32>
      %cst_24 = arith.constant 2.000000e+00 : f32
      %53 = vector.broadcast %cst_24 : f32 to vector<8x128xf32>
      %54 = arith.mulf %53, %41 : vector<8x128xf32>
      %55 = math.exp %54 : vector<8x128xf32>
      %cst_25 = arith.constant 7.500000e-01 : f32
      %56 = vector.broadcast %cst_25 : f32 to vector<8x128xf32>
      %57 = arith.mulf %56, %55 : vector<8x128xf32>
      %58 = arith.mulf %57, %46 : vector<8x128xf32>
      %59 = arith.subf %52, %58 : vector<8x128xf32>
      %60 = tpu.iota {dimensions = array<i32: 0>} : vector<8x128xi32>
      %61 = tpu.iota {dimensions = array<i32: 1>} : vector<8x128xi32>
      %c128_i32 = arith.constant 128 : i32
      %62 = vector.broadcast %c128_i32 : i32 to vector<8x128xi32>
      %63 = arith.muli %60, %62 : vector<8x128xi32>
      %64 = arith.addi %63, %61 : vector<8x128xi32>
      %c8_i32 = arith.constant 8 : i32
      %65 = vector.broadcast %c8_i32 : i32 to vector<8x128xi32>
      %66 = arith.cmpi slt, %64, %65 : vector<8x128xi32>
      %cst_26 = arith.constant 0.000000e+00 : f32
      %67 = vector.broadcast %cst_26 : f32 to vector<8x128xf32>
      %68 = arith.select %66, %59, %67 : vector<8x128xi1>, vector<8x128xf32>
      %c0_i32_27 = arith.constant 0 : i32
      %69 = arith.cmpi eq, %arg0, %c0_i32_27 : i32
      %70 = vector.shape_cast %68 : vector<8x128xf32> to vector<1x8x128xf32>
      %cst_28 = arith.constant dense<0.000000e+00> : vector<1xf32>
      %71 = vector.multi_reduction <add>, %70, %cst_28 [1, 2] : vector<1x8x128xf32> to vector<1xf32>
      %72 = vector.shape_cast %71 : vector<1xf32> to vector<1x1x1xf32>
      %73 = vector.extract %72[0, 0, 0] : f32 from vector<1x1x1xf32>
      %cst_29 = arith.constant 0.000000e+00 : f32
      %74 = arith.select %69, %73, %cst_29 : f32
      %75 = arith.subf %32, %74 : f32
      %76 = vector.broadcast %75 : f32 to vector<1x128xf32>
      %c0_30 = arith.constant 0 : index
      %c0_31 = arith.constant 0 : index
      %77 = vector.load %arg4[%c0_30, %c0_31] : memref<1x128xf32, #tpu.memory_space<vmem>>, vector<1x128xf32>
      tpu.vector_store %arg4[%c0_30, %c0_31], %76 {strides = array<i32>} : memref<1x128xf32, #tpu.memory_space<vmem>>, vector<1x128xf32>,
    } else {
    }
    return
  }
  func.func @transform_0(%arg0: i32, %arg1: i32) -> (i32, i32) {
    %c1_i32 = arith.constant 1 : i32
    %0 = arith.muli %arg0, %c1_i32 : i32
    %1 = arith.addi %0, %arg1 : i32
    %c0_i32 = arith.constant 0 : i32
    %c0_i32_0 = arith.constant 0 : i32
    return %1, %c0_i32 : i32, i32
  }
  func.func @transform_1(%arg0: i32, %arg1: i32) -> (i32, i32) {
    %c0_i32 = arith.constant 0 : i32
    %c0_i32_0 = arith.constant 0 : i32
    %c0_i32_1 = arith.constant 0 : i32
    return %c0_i32, %c0_i32_0 : i32, i32
  }
  func.func @transform_2(%arg0: i32, %arg1: i32) -> (i32, i32) {
    %c0_i32 = arith.constant 0 : i32
    %c0_i32_0 = arith.constant 0 : i32
    return %c0_i32, %arg0 : i32, i32
  }
}

</mosaic_0001>

<llo_original>
// kernel: tpu_custom_call.1
$region0: #{tpu_custom_call.1}
  #allocation0 [shape = 'u32[]', space=smem, size = 0x4, offset = 0x4, fixed_abs, tag = 'smem constant byte address 0x4 - core index']
  #allocation1 [shape = 'u32[144,128]{1,0:T(1,128)}', space=vmem, size = 0x12000, scoped, tag = 'internal scratch']
  #allocation2 [shape = 'f32[8,512]{1,0:T(8,128)}', space=vmem, size = 0x4000, scoped, tag = 'scratch operand']
  %s0 = inlined_call_operand.hbm [shape: f32[8,512], index: 0, kind: input, shape index: {}]
  %s1 = inlined_call_operand.hbm [shape: f32[8,128], index: 1, kind: input, shape index: {}]
  %s2 = inlined_call_operand.hbm [shape: f32[1,128], index: 2, kind: output, shape index: {}]
  %s3 = sld [smem:[#allocation0]]
  $region34: #{tpu_custom_call.1} parent=0
    _
  %s5 = ssub.s32 1, %s3
  %s6 = scalar_select 0, %s5, %s3
  $region1: #{tpu_custom_call.1} parent=0
    #allocation3 [shape = 'u8[16384]{0}', space=vmem, size = 0x4000, scoped, tag = 'input window, operand 0, single buffered']
    #allocation4 [shape = 's32[1]{0}', space=sflag, size = 0x4, scoped, tag = 'scoped memory for tpu_custom_call.1']
    #allocation5 [shape = 's32[1]{0}', space=sflag, size = 0x4, scoped, tag = 'scoped memory for tpu_custom_call.1']
    #allocation6 [shape = 'u8[4096]{0}', space=vmem, size = 0x1000, scoped, tag = 'input window, operand 1, single buffered']
    #allocation7 [shape = 's32[1]{0}', space=sflag, size = 0x4, scoped, tag = 'scoped memory for tpu_custom_call.1']
    #allocation8 [shape = 'u8[512]{0}', space=vmem, size = 0x400, scoped, tag = 'output window, operand 0, single buffered']
    %7 = vsyncpa [#allocation4], 0
    %8 = vsyncpa [#allocation7], 0
    %9 = vsyncpa [#allocation5], 0
    // Predicated region
    $region2: #{tpu_custom_call.1} parent=1 // pred_check
      _
    $region3: #{tpu_custom_call.1} parent=1 // pred_check_branch
      %11 = sbr.rel (0) target = $region5
    $region4: #{tpu_custom_call.1} parent=1 // pred_region
      %s12 = sadd.s32 0, 0
      %s14 = ssub.s32 512, 512
      %15 = vsyncadd [#allocation4], %s14
      %s16 = smul.addr %s12, 4
      %s17 = smul.addr %s16, 128
      %s18 = scalar_lea.hbm %s0, %s17
      %s20 = sshll.u32 [#allocation3], 4
      %s21 = int_to_ptr.vmem [resolvable:$true] %s20
      %23 = dma.hbm_to_vmem [thread:$0]  %s18, 512, %s21, [#allocation4]
    $region5: #{tpu_custom_call.1} parent=1 // pred_fallthru
      _
    // Predicated region
    $region6: #{tpu_custom_call.1} parent=1 // pred_check
      _
    $region7: #{tpu_custom_call.1} parent=1 // pred_check_branch
      %25 = sbr.rel (0) target = $region9
    $region8: #{tpu_custom_call.1} parent=1 // pred_region
      %s27 = ssub.s32 128, 128
      %28 = vsyncadd [#allocation7], %s27
      %s30 = sshll.u32 [#allocation6], 4
      %s31 = int_to_ptr.vmem [resolvable:$true] %s30
      %33 = dma.hbm_to_vmem [thread:$0]  %s1, 128, %s31, [#allocation7]
    $region9: #{tpu_custom_call.1} parent=1 // pred_fallthru
      _
    // Predicated region
    $region10: #{tpu_custom_call.1} parent=1 // pred_check
      _
    $region11: #{tpu_custom_call.1} parent=1 // pred_check_branch
      %35 = sbr.rel (0) target = $region13
    $region12: #{tpu_custom_call.1} parent=1 // pred_region
      %36 = dma.done [#allocation4], 512
    $region13: #{tpu_custom_call.1} parent=1 // pred_fallthru
      _
    // Predicated region
    $region14: #{tpu_custom_call.1} parent=1 // pred_check
      _
    $region15: #{tpu_custom_call.1} parent=1 // pred_check_branch
      %38 = sbr.rel (0) target = $region17
    $region16: #{tpu_custom_call.1} parent=1 // pred_region
      %39 = dma.done [#allocation7], 128
    $region17: #{tpu_custom_call.1} parent=1 // pred_fallthru
      _
    %s40 = sadd.s32 0, 0
    %p41 = scmp.eq.s32.totalorder 0, 0
    // Predicated region
    $region18: #{tpu_custom_call.1} parent=1 // pred_check
      %p42 = pneg %p41
    $region19: #{tpu_custom_call.1} parent=1 // pred_check_branch
      %44 = sbr.rel (%p42) target = $region21
    $region20: #{tpu_custom_call.1} parent=1 // pred_region
      %45 = vst [vmem:[#allocation2] sm:$0xff] 0.0
      %46 = vst [vmem:[#allocation2 + $0x8] sm:$0xff] 0.0
      %47 = vst [vmem:[#allocation2 + $0x10] sm:$0xff] 0.0
      %48 = vst [vmem:[#allocation2 + $0x18] sm:$0xff] 0.0
    $region21: #{tpu_custom_call.1} parent=1 // pred_fallthru
      _
    %v49 = vld [vmem:[#allocation3] sm:$0xff]
    %v50 = vld [vmem:[#allocation3 + $0x8] sm:$0xff]
    %v51 = vld [vmem:[#allocation3 + $0x10] sm:$0xff]
    %v52 = vld [vmem:[#allocation3 + $0x18] sm:$0xff]
    %v53 = vand.u32 2147483647, %v49
    %v54 = vand.u32 2147483647, %v50
    %v55 = vand.u32 2147483647, %v51
    %v56 = vand.u32 2147483647, %v52
    %v57 = vsub.f32 0.0, %v53
    %v58 = vsub.f32 0.0, %v54
    %v59 = vsub.f32 0.0, %v55
    %v60 = vsub.f32 0.0, %v56
    %v61 = vmul.f32 %v57, 1.442695
    %v62 = vpow.pop %v61
    %v63 = vmul.f32 %v58, 1.442695
    %v64 = vpow.pop %v63
    %v65 = vmul.f32 %v59, 1.442695
    %v66 = vpow.pop %v65
    %v67 = vmul.f32 %v60, 1.442695
    %v68 = vpow.pop %v67
    %v69 = vadd.f32 %v62, 1.0
    %v70 = vlog2.pop %v69
    %v71 = vmul.f32 %v70, 0.6931472
    %v72 = vmul.f32 -0.5, %v62
    %v73 = vadd.f32 %v72, 1.0
    %v74 = vmul.f32 %v73, %v62
    %v75 = vand.u32 2147483647, %v62
    %vm76 = vcmp.lt.f32.partialorder %v75, 0.0004427343
    %v77 = vsel %vm76, %v74, %v71
    %v78 = vadd.f32 %v64, 1.0
    %v79 = vlog2.pop %v78
    %v80 = vmul.f32 %v79, 0.6931472
    %v81 = vmul.f32 -0.5, %v64
    %v82 = vadd.f32 %v81, 1.0
    %v83 = vmul.f32 %v82, %v64
    %v84 = vand.u32 2147483647, %v64
    %vm85 = vcmp.lt.f32.partialorder %v84, 0.0004427343
    %v86 = vsel %vm85, %v83, %v80
    %v87 = vadd.f32 %v66, 1.0
    %v88 = vlog2.pop %v87
    %v89 = vmul.f32 %v88, 0.6931472
    %v90 = vmul.f32 -0.5, %v66
    %v91 = vadd.f32 %v90, 1.0
    %v92 = vmul.f32 %v91, %v66
    %v93 = vand.u32 2147483647, %v66
    %vm94 = vcmp.lt.f32.partialorder %v93, 0.0004427343
    %v95 = vsel %vm94, %v92, %v89
    %v96 = vadd.f32 %v68, 1.0
    %v97 = vlog2.pop %v96
    %v98 = vmul.f32 %v97, 0.6931472
    %v99 = vmul.f32 -0.5, %v68
    %v100 = vadd.f32 %v99, 1.0
    %v101 = vmul.f32 %v100, %v68
    %v102 = vand.u32 2147483647, %v68
    %vm103 = vcmp.lt.f32.partialorder %v102, 0.0004427343
    %v104 = vsel %vm103, %v101, %v98
    %v105 = vmin.f32 %v49, 0.0
    %v106 = vmin.f32 %v50, 0.0
    %v107 = vmin.f32 %v51, 0.0
    %v108 = vmin.f32 %v52, 0.0
    %v109 = vsub.f32 %v105, %v77
    %v110 = vsub.f32 %v106, %v86
    %v111 = vsub.f32 %v107, %v95
    %v112 = vsub.f32 %v108, %v104
    %v113 = vsub.f32 0.0, %v49
    %v114 = vsub.f32 0.0, %v50
    %v115 = vsub.f32 0.0, %v51
    %v116 = vsub.f32 0.0, %v52
    %v117 = vmin.f32 %v113, 0.0
    %v118 = vmin.f32 %v114, 0.0
    %v119 = vmin.f32 %v115, 0.0
    %v120 = vmin.f32 %v116, 0.0
    %v121 = vsub.f32 %v117, %v77
    %v122 = vsub.f32 %v118, %v86
    %v123 = vsub.f32 %v119, %v95
    %v124 = vsub.f32 %v120, %v104
    %v125 = vmul.f32 %v109, 2.0
    %v126 = vmul.f32 %v110, 2.0
    %v127 = vmul.f32 %v111, 2.0
    %v128 = vmul.f32 %v112, 2.0
    %v129 = vmul.f32 %v125, 1.442695
    %v130 = vpow.pop %v129
    %v131 = vmul.f32 %v126, 1.442695
    %v132 = vpow.pop %v131
    %v133 = vmul.f32 %v127, 1.442695
    %v134 = vpow.pop %v133
    %v135 = vmul.f32 %v128, 1.442695
    %v136 = vpow.pop %v135
    %v137 = vmul.f32 %v130, %v121
    %v138 = vmul.f32 %v132, %v122
    %v139 = vmul.f32 %v134, %v123
    %v140 = vmul.f32 %v136, %v124
    %v141 = vld [vmem:[#allocation2] sm:$0xff]
    %v142 = vld [vmem:[#allocation2 + $0x8] sm:$0xff]
    %v143 = vld [vmem:[#allocation2 + $0x10] sm:$0xff]
    %v144 = vld [vmem:[#allocation2 + $0x18] sm:$0xff]
    %v145 = vadd.f32 %v141, %v137
    %v146 = vadd.f32 %v142, %v138
    %v147 = vadd.f32 %v143, %v139
    %v148 = vadd.f32 %v144, %v140
    %149 = vst [vmem:[#allocation2] sm:$0xff] %v145
    %150 = vst [vmem:[#allocation2 + $0x8] sm:$0xff] %v146
    %151 = vst [vmem:[#allocation2 + $0x10] sm:$0xff] %v147
    %152 = vst [vmem:[#allocation2 + $0x18] sm:$0xff] %v148
    // Predicated region
    $region22: #{tpu_custom_call.1} parent=1 // pred_check
      %p153 = pneg %p41
    $region23: #{tpu_custom_call.1} parent=1 // pred_check_branch
      %155 = sbr.rel (%p153) target = $region25
    $region24: #{tpu_custom_call.1} parent=1 // pred_region
      %v156 = vld [vmem:[#allocation2] sm:$0xff]
      %v157 = vld [vmem:[#allocation2 + $0x8] sm:$0xff]
      %v158 = vld [vmem:[#allocation2 + $0x10] sm:$0xff]
      %v159 = vld [vmem:[#allocation2 + $0x18] sm:$0xff]
      %v160 = vadd.f32 %v156, %v157
      %v161 = vadd.f32 %v160, %v158
      %v162 = vadd.f32 %v161, %v159
      %163 = vadd.xlane.f32.xlu0 %v162
      %v164 = vpop.xlane.xlu0 %163
      %v165 = vrot.slane %v164, 4
      %v166 = vadd.f32 %v164, %v165
      %v167 = vrot.slane %v166, 2
      %v168 = vadd.f32 %v166, %v167
      %v169 = vrot.slane %v168, 1
      %v170 = vadd.f32 %v168, %v169
      %s171 = vtos %v170
      %s172 = smul.f32 %s171, -0.75
      %v173 = vld [vmem:[#allocation6] sm:$0xff]
      %v174 = vand.u32 2147483647, %v173
      %v175 = vsub.f32 0.0, %v174
      %v176 = vmul.f32 %v175, 1.442695
      %v177 = vpow.pop %v176
      %v178 = vadd.f32 %v177, 1.0
      %v179 = vlog2.pop %v178
      %v180 = vmul.f32 %v179, 0.6931472
      %v181 = vmul.f32 -0.5, %v177
      %v182 = vadd.f32 %v181, 1.0
      %v183 = vmul.f32 %v182, %v177
      %v184 = vand.u32 2147483647, %v177
      %vm185 = vcmp.lt.f32.partialorder %v184, 0.0004427343
      %v186 = vsel %vm185, %v183, %v180
      %v187 = vmin.f32 %v173, 0.0
      %v188 = vsub.f32 %v187, %v186
      %v189 = vsub.f32 0.0, %v173
      %v190 = vmin.f32 %v189, 0.0
      %v191 = vsub.f32 %v190, %v186
      %v192 = vmul.f32 %v191, 2.0
      %v193 = vmul.f32 %v192, 1.442695
      %v194 = vpow.pop %v193
      %v195 = vmul.f32 %v194, 0.25
      %v196 = vmul.f32 %v195, %v188
      %v197 = vmul.f32 %v188, 2.0
      %v198 = vmul.f32 %v197, 1.442695
      %v199 = vpow.pop %v198
      %v200 = vmul.f32 %v199, 0.75
      %v201 = vmul.f32 %v200, %v191
      %v202 = vsub.f32 %v196, %v201
      %v203 = vlaneseq
      %v204 = vshrl.u32 %v203, 7
      %v205 = vlaneseq
      %v206 = vand.u32 %v205, 127
      %v207 = vmul.u32 %v204, 128
      %v208 = vadd.s32 %v207, %v206
      %vm209 = vcmp.lt.s32.totalorder %v208, 8
      %v210 = vsel %vm209, %v202, 0.0
      %p211 = scmp.eq.s32.totalorder 0, 0
      %212 = vadd.xlane.f32.xlu0 %v210
      %v213 = vpop.xlane.xlu0 %212
      %v214 = vrot.slane %v213, 4
      %v215 = vadd.f32 %v213, %v214
      %v216 = vrot.slane %v215, 2
      %v217 = vadd.f32 %v215, %v216
      %v218 = vrot.slane %v217, 1
      %v219 = vadd.f32 %v217, %v218
      %s220 = vtos %v219
      %s221 = scalar_select %p211, %s220, 0.0
      %s222 = ssub.f32 %s172, %s221
      %v223 = vstv %s222
      %224 = vst [vmem:[#allocation8] sm:$0x1] %v223
    $region25: #{tpu_custom_call.1} parent=1 // pred_fallthru
      _
    // Predicated region
    $region26: #{tpu_custom_call.1} parent=1 // pred_check
      _
    $region27: #{tpu_custom_call.1} parent=1 // pred_check_branch
      %226 = sbr.rel (0) target = $region29
    $region28: #{tpu_custom_call.1} parent=1 // pred_region
      %s228 = ssub.s32 16, 16
      %229 = vsyncadd [#allocation5], %s228
      %s231 = sshll.u32 [#allocation8], 4
      %s232 = int_to_ptr.vmem [resolvable:$true] %s231
      %234 = dma.vmem_to_hbm [thread:$0]  %s232, 16, %s2, [#allocation5]
    $region29: #{tpu_custom_call.1} parent=1 // pred_fallthru
      _
    // Predicated region
    $region30: #{tpu_custom_call.1} parent=1 // pred_check
      _
    $region31: #{tpu_custom_call.1} parent=1 // pred_check_branch
      %236 = sbr.rel (0) target = $region33
    $region32: #{tpu_custom_call.1} parent=1 // pred_region
      %237 = dma.done [#allocation5], 16
    $region33: #{tpu_custom_call.1} parent=1 // pred_fallthru
      _
    %238 = vsyncpa [#allocation4], 1
    %239 = vsyncpa [#allocation7], 1
    %240 = vsyncpa [#allocation5], 1

</llo_original>
